<compile_context>
chip_gen: v6e
topology: v6e:2x2x1
jax: 0.10.0
libtpu: 0.0.40
codegen_flags: <defaults>
</compile_context>

<pallas_src>
import jax
import jax.numpy as jnp
from jax import lax
from jax.experimental import pallas as pl
from jax.experimental.pallas import tpu as pltpu

NP = 128  # lane-padded head width (cols: 0-3 bbox, 4 cls, 5-7 loss terms, rest 0)


def _make_net_kernel(HW):
    inv_hw = 1.0 / float(HW)

    def kernel(x_ref, wconv_ref, wheads_ref, bheads_ref, labels_ref,
               preds_ref, acc_ref):
        m = pl.program_id(1)

        # ---- init GAP accumulator for this batch row ----
        @pl.when(m == 0)
        def _():
            acc_ref[...] = jnp.zeros_like(acc_ref)

        # ---- backbone stub: fused 3x3 conv (im2col matmul, bias folded into a
        #      ones lane) -> ReLU -> partial global average pool ----
        x = x_ref[0]                                              # (TM, KP)
        h = jnp.dot(x, wconv_ref[...],
                    preferred_element_type=jnp.float32)           # (TM, F) one MXU push
        h = jnp.maximum(h, 0.0)                                   # ReLU
        acc_ref[...] += jnp.sum(h, axis=0, keepdims=True)         # (1, F) partial GAP (XLU)

        # ---- finalize: fused heads + preds + per-sample loss terms ----
        @pl.when(m == pl.num_programs(1) - 1)
        def _():
            feat = acc_ref[...] * inv_hw                          # (1, F)
            head = jnp.dot(feat, wheads_ref[...],
                           preferred_element_type=jnp.float32) + bheads_ref[...]  # (1, NP)
            labels = labels_ref[0]                                # (1, NP)
            col = lax.broadcasted_iota(jnp.int32, (1, NP), 1)

            # sigmoid only kept on the cls column (EUP exp + approx reciprocal)
            sig = pl.reciprocal(1.0 + jnp.exp(-head), approx=True)
            preds_row = jnp.where(col == 4, sig, head)

            # scalar extractions (mask+sum keeps everything 2-D / lane friendly)
            logit_cls = jnp.sum(jnp.where(col == 4, head, 0.0), axis=1, keepdims=True)
            label_cls = jnp.clip(
                jnp.sum(jnp.where(col == 4, labels, 0.0), axis=1, keepdims=True),
                0.05, 0.95)
            sel = (label_cls > 0.5).astype(jnp.float32)           # (1, 1)

            # L1 numerator over the 4 bbox columns, zeroed if row not selected
            abs_err = sel * jnp.sum(
                jnp.where(col < 4, jnp.abs(head - labels), 0.0),
                axis=1, keepdims=True)
            # numerically-stable BCE-with-logits, per sample
            z, y = logit_cls, label_cls
            bce = jnp.maximum(z, 0.0) - z * y + jnp.log(1.0 + jnp.exp(-jnp.abs(z)))

            # pack loss terms into padded lanes; single lane-dense store
            preds_row = jnp.where(col == 5, abs_err, preds_row)
            preds_row = jnp.where(col == 6, sel, preds_row)
            preds_row = jnp.where(col == 7, bce, preds_row)
            preds_ref[0] = preds_row

    return kernel


def _pick_tile_m(HW, max_tile=512):
    """Largest multiple-of-8 divisor of HW (capped), else HW itself."""
    if HW % 8 != 0:
        return HW
    tm = 8
    for cand in range(8, min(HW, max_tile) + 1, 8):
        if HW % cand == 0:
            tm = cand
    return tm


def init_params(key, in_chans, feat_dim):
    k1, k2, k3 = jax.random.split(key, 3)
    w_conv = jax.random.normal(k1, (3, 3, in_chans, feat_dim), jnp.float32) / jnp.sqrt(9.0 * in_chans)
    b_conv = jnp.zeros((1, feat_dim), jnp.float32)
    w_bb = jax.random.normal(k2, (feat_dim, 4), jnp.float32) / jnp.sqrt(float(feat_dim))
    b_bb = jnp.zeros((1, 4), jnp.float32)
    w_cls = jax.random.normal(k3, (feat_dim, 1), jnp.float32) / jnp.sqrt(float(feat_dim))
    b_cls = jnp.zeros((1, 1), jnp.float32)
    return dict(w_conv=w_conv, b_conv=b_conv, w_bb=w_bb, b_bb=b_bb,
                w_cls=w_cls, b_cls=b_cls)


def net_forward(image_nchw, labels, params, loss_weights=(1.0, 1.0), max_tile_m=512):
    """image_nchw: (B, Cin, H, W) f32 (PyTorch convention); labels: (B, 5)."""
    x = jnp.transpose(image_nchw, (0, 2, 3, 1)).astype(jnp.float32)   # NCHW -> NHWC
    B, H, W, Cin = x.shape
    F = params["w_conv"].shape[-1]
    HW = H * W
    K = 9 * Cin
    KP = pl.cdiv(K + 1, 128) * 128                                    # lane-align K (+1 bias lane)

    # ---- wrapper-side im2col: lane-dense (B, HW, KP); lane K carries 1.0 (bias) ----
    x_pad = jnp.pad(x, ((0, 0), (1, 1), (1, 1), (0, 0)))              # 'same' halo
    patches = jnp.stack(
        [x_pad[:, dy:dy + H, dx:dx + W, :] for dy in range(3) for dx in range(3)],
        axis=3)                                                       # (B, H, W, 9, Cin)
    xcol = patches.reshape(B, HW, K)
    xcol = jnp.concatenate(
        [xcol, jnp.ones((B, HW, 1), jnp.float32),
         jnp.zeros((B, HW, KP - K - 1), jnp.float32)], axis=2)        # (B, HW, KP)

    # conv weights (+ bias row at index K) -> (KP, F); fused head weights -> (F, NP)
    w_conv = jnp.concatenate(
        [params["w_conv"].reshape(K, F), params["b_conv"].reshape(1, F),
         jnp.zeros((KP - K - 1, F), jnp.float32)], axis=0)            # (KP, F)
    w_heads = jnp.concatenate([params["w_bb"], params["w_cls"]], axis=1)   # (F, 5)
    w_heads = jnp.pad(w_heads, ((0, 0), (0, NP - 5)))
    b_heads = jnp.concatenate([params["b_bb"], params["b_cls"]], axis=1)   # (1, 5)
    b_heads = jnp.pad(b_heads, ((0, 0), (0, NP - 5)))

    labels_pad = jnp.pad(labels.astype(jnp.float32),
                         ((0, 0), (0, NP - labels.shape[1]))).reshape(B, 1, NP)

    tm = _pick_tile_m(HW, max_tile_m)
    m_tiles = HW // tm

    kernel = _make_net_kernel(HW)

    preds_pad = pl.pallas_call(
        kernel,
        out_shape=jax.ShapeDtypeStruct((B, 1, NP), jnp.float32),
        grid_spec=pltpu.PrefetchScalarGridSpec(
            num_scalar_prefetch=0,
            grid=(B, m_tiles),
            in_specs=[
                pl.BlockSpec((1, tm, KP), lambda b, m: (b, m, 0)),     # im2col tile
                pl.BlockSpec((KP, F), lambda b, m: (0, 0)),            # conv weight (+bias row)
                pl.BlockSpec((F, NP), lambda b, m: (0, 0)),            # fused head weight
                pl.BlockSpec((1, NP), lambda b, m: (0, 0)),            # fused head bias
                pl.BlockSpec((1, 1, NP), lambda b, m: (b, 0, 0)),      # labels row
            ],
            out_specs=pl.BlockSpec((1, 1, NP), lambda b, m: (b, 0, 0)),
            scratch_shapes=[pltpu.VMEM((1, F), jnp.float32)],          # GAP accumulator
        ),
        compiler_params=pltpu.CompilerParams(
            dimension_semantics=("parallel", "arbitrary"),
            vmem_limit_bytes=32 * 1024 * 1024,
        ),
    )(xcol, w_conv, w_heads, b_heads, labels_pad)

    terms = preds_pad[:, 0, :]                                         # (B, NP)
    preds = terms[:, :5]                                               # [bbox logits | sigmoid(cls)]

    # tiny size-B reductions of the per-sample loss terms emitted by the kernel
    abs_err_sum = jnp.sum(terms[:, 5])
    n_sel = jnp.sum(terms[:, 6])
    bce_sum = jnp.sum(terms[:, 7])
    # NOTE: PyTorch L1Loss over an empty selection yields NaN (the module just
    # prints a warning); here we guard to 0.0 to keep the kernel NaN-free.
    loss_bb = jnp.where(n_sel > 0, abs_err_sum / (jnp.maximum(n_sel, 1.0) * 4.0), 0.0)
    loss_cls = bce_sum / float(B)
    loss = loss_weights[0] * loss_bb + loss_weights[1] * loss_cls

    return {
        "preds": preds,            # (B, 5): [bbox logits (4), sigmoid(cls logit)]
        "loss": loss,
        "loss_bbox": loss_bb,
        "loss_cls": loss_cls,
        # StudyUID / slice_numbers are pure passthrough metadata in the
        # original module and are omitted here.
    }


if __name__ == "__main__":
    B, WINDOWS, H, W, FEAT = 2, 2, 16, 16, 128
    Cin = WINDOWS * 3                         # len(cfg.windows) * 3 input channels

    key = jax.random.PRNGKey(0)
    k_img, k_lbl, k_par = jax.random.split(key, 3)

    image = jax.random.normal(k_img, (B, Cin, H, W), jnp.float32)      # NCHW, like PyTorch
    bbox_labels = jax.random.uniform(k_lbl, (B, 4), jnp.float32)
    cls_labels = jnp.array([[0.9], [0.2]], jnp.float32)                # ensure >=1 positive row
    labels = jnp.concatenate([bbox_labels, cls_labels], axis=1)        # (B, 5)

    params = init_params(k_par, Cin, FEAT)

    out = net_forward(image, labels, params, loss_weights=(1.0, 1.0))
    jax.block_until_ready(out)
    print("KERNEL_OK")
</pallas_src>

<mosaic_0001>
module attributes {stable_mosaic.version = 11 : i64} {
  func.func @kernel(%arg0: i32, %arg1: i32, %arg2: memref<1x256x128xf32, #tpu.memory_space<vmem>>, %arg3: memref<128x128xf32, #tpu.memory_space<vmem>>, %arg4: memref<128x128xf32, #tpu.memory_space<vmem>>, %arg5: memref<1x128xf32, #tpu.memory_space<vmem>>, %arg6: memref<1x1x128xf32, #tpu.memory_space<vmem>>, %arg7: memref<1x1x128xf32, #tpu.memory_space<vmem>>, %arg8: memref<1x128xf32, #tpu.memory_space<vmem>>) attributes {dimension_semantics = [#tpu.dimension_semantics<parallel>, #tpu.dimension_semantics<arbitrary>], iteration_bounds = array<i64: 2, 1>, scalar_prefetch = 0 : i64, scratch_operands = 1 : i64, tpu.core_type = #tpu.core_type<tc>, window_params = [{transform_indices = @transform_0, window_bounds = array<i64: 1, 256, 128>}, {pipeline_mode = #tpu.pipeline_mode<synchronous>, transform_indices = @transform_1, window_bounds = array<i64: 128, 128>}, {pipeline_mode = #tpu.pipeline_mode<synchronous>, transform_indices = @transform_2, window_bounds = array<i64: 128, 128>}, {pipeline_mode = #tpu.pipeline_mode<synchronous>, transform_indices = @transform_3, window_bounds = array<i64: 1, 128>}, {transform_indices = @transform_4, window_bounds = array<i64: 1, 1, 128>}, {transform_indices = @transform_5, window_bounds = array<i64: 1, 1, 128>}]} {
    %c0_i32 = arith.constant 0 : i32
    %0 = arith.cmpi eq, %arg1, %c0_i32 : i32
    %1 = arith.extui %0 : i1 to i32
    %c0_i32_0 = arith.constant 0 : i32
    %2 = arith.cmpi ne, %1, %c0_i32_0 : i32
    scf.if %2 {
      %cst_13 = arith.constant 0.000000e+00 : f32
      %17 = vector.broadcast %cst_13 : f32 to vector<1x128xf32>
      %c0_14 = arith.constant 0 : index
      %c0_15 = arith.constant 0 : index
      %18 = vector.load %arg8[%c0_14, %c0_15] : memref<1x128xf32, #tpu.memory_space<vmem>>, vector<1x128xf32>
      tpu.vector_store %arg8[%c0_14, %c0_15], %17 {strides = array<i32>} : memref<1x128xf32, #tpu.memory_space<vmem>>, vector<1x128xf32>,
    } else {
    }
    %c0 = arith.constant 0 : index
    %c0_1 = arith.constant 0 : index
    %c0_2 = arith.constant 0 : index
    %3 = vector.load %arg2[%c0, %c0_1, %c0_2] : memref<1x256x128xf32, #tpu.memory_space<vmem>>, vector<1x256x128xf32>
    %4 = vector.shape_cast %3 : vector<1x256x128xf32> to vector<256x128xf32>
    %c0_3 = arith.constant 0 : index
    %c0_4 = arith.constant 0 : index
    %5 = vector.load %arg3[%c0_3, %c0_4] : memref<128x128xf32, #tpu.memory_space<vmem>>, vector<128x128xf32>
    %cst = arith.constant dense<0.000000e+00> : vector<256x128xf32>
    %6 = tpu.matmul %4, %5, %cst {dimension_numbers = #tpu.dot_dimension_numbers<[1], [0], [0], [1], [0, 0, 1, 1], [], []>} : vector<256x128xf32>, vector<128x128xf32>, vector<256x128xf32> -> vector<256x128xf32>
    %cst_5 = arith.constant 0.000000e+00 : f32
    %7 = vector.broadcast %cst_5 : f32 to vector<256x128xf32>
    %8 = arith.maximumf %6, %7 : vector<256x128xf32>
    %c0_6 = arith.constant 0 : index
    %c0_7 = arith.constant 0 : index
    %9 = vector.load %arg8[%c0_6, %c0_7] : memref<1x128xf32, #tpu.memory_space<vmem>>, vector<1x128xf32>
    %cst_8 = arith.constant dense<0.000000e+00> : vector<128xf32>
    %10 = vector.multi_reduction <add>, %8, %cst_8 [0] : vector<256x128xf32> to vector<128xf32>
    %11 = vector.shape_cast %10 : vector<128xf32> to vector<1x128xf32>
    %12 = arith.addf %9, %11 : vector<1x128xf32>
    %c0_9 = arith.constant 0 : index
    %c0_10 = arith.constant 0 : index
    %13 = vector.load %arg8[%c0_9, %c0_10] : memref<1x128xf32, #tpu.memory_space<vmem>>, vector<1x128xf32>
    tpu.vector_store %arg8[%c0_9, %c0_10], %12 {strides = array<i32>} : memref<1x128xf32, #tpu.memory_space<vmem>>, vector<1x128xf32>,
    %c0_i32_11 = arith.constant 0 : i32
    %14 = arith.cmpi eq, %arg1, %c0_i32_11 : i32
    %15 = arith.extui %14 : i1 to i32
    %c0_i32_12 = arith.constant 0 : i32
    %16 = arith.cmpi ne, %15, %c0_i32_12 : i32
    scf.if %16 {
      %c0_13 = arith.constant 0 : index
      %c0_14 = arith.constant 0 : index
      %17 = vector.load %arg8[%c0_13, %c0_14] : memref<1x128xf32, #tpu.memory_space<vmem>>, vector<1x128xf32>
      %cst_15 = arith.constant 3.906250e-03 : f32
      %18 = vector.broadcast %cst_15 : f32 to vector<1x128xf32>
      %19 = arith.mulf %17, %18 : vector<1x128xf32>
      %c0_16 = arith.constant 0 : index
      %c0_17 = arith.constant 0 : index
      %20 = vector.load %arg4[%c0_16, %c0_17] : memref<128x128xf32, #tpu.memory_space<vmem>>, vector<128x128xf32>
      %cst_18 = arith.constant dense<0.000000e+00> : vector<1x128xf32>
      %21 = tpu.matmul %19, %20, %cst_18 {dimension_numbers = #tpu.dot_dimension_numbers<[1], [0], [0], [1], [0, 0, 1, 1], [], []>} : vector<1x128xf32>, vector<128x128xf32>, vector<1x128xf32> -> vector<1x128xf32>
      %c0_19 = arith.constant 0 : index
      %c0_20 = arith.constant 0 : index
      %22 = vector.load %arg5[%c0_19, %c0_20] : memref<1x128xf32, #tpu.memory_space<vmem>>, vector<1x128xf32>
      %23 = arith.addf %21, %22 : vector<1x128xf32>
      %c0_21 = arith.constant 0 : index
      %c0_22 = arith.constant 0 : index
      %c0_23 = arith.constant 0 : index
      %24 = vector.load %arg6[%c0_21, %c0_22, %c0_23] : memref<1x1x128xf32, #tpu.memory_space<vmem>>, vector<1x1x128xf32>
      %25 = vector.shape_cast %24 : vector<1x1x128xf32> to vector<1x128xf32>
      %26 = tpu.iota {dimensions = array<i32: 1>} : vector<1x128xi32>
      %cst_24 = arith.constant 0.000000e+00 : f32
      %27 = vector.broadcast %cst_24 : f32 to vector<1x128xf32>
      %28 = arith.subf %27, %23 : vector<1x128xf32>
      %29 = math.exp %28 : vector<1x128xf32>
      %cst_25 = arith.constant 1.000000e+00 : f32
      %30 = vector.broadcast %cst_25 : f32 to vector<1x128xf32>
      %31 = arith.addf %30, %29 : vector<1x128xf32>
      %32 = tpu.reciprocal %31 {approx = true} : vector<1x128xf32> -> vector<1x128xf32>
      %c4_i32 = arith.constant 4 : i32
      %33 = vector.broadcast %c4_i32 : i32 to vector<1x128xi32>
      %34 = arith.cmpi eq, %26, %33 : vector<1x128xi32>
      %35 = arith.select %34, %32, %23 : vector<1x128xi1>, vector<1x128xf32>
      %c4_i32_26 = arith.constant 4 : i32
      %36 = vector.broadcast %c4_i32_26 : i32 to vector<1x128xi32>
      %37 = arith.cmpi eq, %26, %36 : vector<1x128xi32>
      %cst_27 = arith.constant 0.000000e+00 : f32
      %38 = vector.broadcast %cst_27 : f32 to vector<1x128xf32>
      %39 = arith.select %37, %23, %38 : vector<1x128xi1>, vector<1x128xf32>
      %cst_28 = arith.constant dense<0.000000e+00> : vector<1xf32>
      %40 = vector.multi_reduction <add>, %39, %cst_28 [1] : vector<1x128xf32> to vector<1xf32>
      %41 = vector.shape_cast %40 : vector<1xf32> to vector<1x1xf32>
      %c4_i32_29 = arith.constant 4 : i32
      %42 = vector.broadcast %c4_i32_29 : i32 to vector<1x128xi32>
      %43 = arith.cmpi eq, %26, %42 : vector<1x128xi32>
      %cst_30 = arith.constant 0.000000e+00 : f32
      %44 = vector.broadcast %cst_30 : f32 to vector<1x128xf32>
      %45 = arith.select %43, %25, %44 : vector<1x128xi1>, vector<1x128xf32>
      %cst_31 = arith.constant dense<0.000000e+00> : vector<1xf32>
      %46 = vector.multi_reduction <add>, %45, %cst_31 [1] : vector<1x128xf32> to vector<1xf32>
      %47 = vector.shape_cast %46 : vector<1xf32> to vector<1x1xf32>
      %cst_32 = arith.constant 5.000000e-02 : f32
      %cst_33 = arith.constant 0.949999988 : f32
      %48 = vector.broadcast %cst_32 : f32 to vector<1x1xf32>
      %49 = arith.maximumf %48, %47 : vector<1x1xf32>
      %50 = vector.broadcast %cst_33 : f32 to vector<1x1xf32>
      %51 = arith.minimumf %50, %49 : vector<1x1xf32>
      %cst_34 = arith.constant 5.000000e-01 : f32
      %52 = vector.broadcast %cst_34 : f32 to vector<1x1xf32>
      %53 = arith.cmpf ogt, %51, %52 : vector<1x1xf32>
      %54 = arith.extui %53 : vector<1x1xi1> to vector<1x1xi32>
      %55 = arith.sitofp %54 : vector<1x1xi32> to vector<1x1xf32>
      %c4_i32_35 = arith.constant 4 : i32
      %56 = vector.broadcast %c4_i32_35 : i32 to vector<1x128xi32>
      %57 = arith.cmpi slt, %26, %56 : vector<1x128xi32>
      %58 = arith.subf %23, %25 : vector<1x128xf32>
      %59 = math.absf %58 : vector<1x128xf32>
      %cst_36 = arith.constant 0.000000e+00 : f32
      %60 = vector.broadcast %cst_36 : f32 to vector<1x128xf32>
      %61 = arith.select %57, %59, %60 : vector<1x128xi1>, vector<1x128xf32>
      %cst_37 = arith.constant dense<0.000000e+00> : vector<1xf32>
      %62 = vector.multi_reduction <add>, %61, %cst_37 [1] : vector<1x128xf32> to vector<1xf32>
      %63 = vector.shape_cast %62 : vector<1xf32> to vector<1x1xf32>
      %64 = arith.mulf %55, %63 : vector<1x1xf32>
      %cst_38 = arith.constant 0.000000e+00 : f32
      %65 = vector.broadcast %cst_38 : f32 to vector<1x1xf32>
      %66 = arith.maximumf %41, %65 : vector<1x1xf32>
      %67 = arith.mulf %41, %51 : vector<1x1xf32>
      %68 = arith.subf %66, %67 : vector<1x1xf32>
      %69 = math.absf %41 : vector<1x1xf32>
      %cst_39 = arith.constant 0.000000e+00 : f32
      %70 = vector.broadcast %cst_39 : f32 to vector<1x1xf32>
      %71 = arith.subf %70, %69 : vector<1x1xf32>
      %72 = math.exp %71 : vector<1x1xf32>
      %cst_40 = arith.constant 1.000000e+00 : f32
      %73 = vector.broadcast %cst_40 : f32 to vector<1x1xf32>
      %74 = arith.addf %73, %72 : vector<1x1xf32>
      %75 = math.log %74 : vector<1x1xf32>
      %76 = arith.addf %68, %75 : vector<1x1xf32>
      %c5_i32 = arith.constant 5 : i32
      %77 = vector.broadcast %c5_i32 : i32 to vector<1x128xi32>
      %78 = arith.cmpi eq, %26, %77 : vector<1x128xi32>
      %79 = vector.shape_cast %64 : vector<1x1xf32> to vector<1x1xf32>
      %80 = vector.broadcast %79 : vector<1x1xf32> to vector<1x128xf32>
      %81 = arith.select %78, %80, %35 : vector<1x128xi1>, vector<1x128xf32>
      %c6_i32 = arith.constant 6 : i32
      %82 = vector.broadcast %c6_i32 : i32 to vector<1x128xi32>
      %83 = arith.cmpi eq, %26, %82 : vector<1x128xi32>
      %84 = vector.shape_cast %55 : vector<1x1xf32> to vector<1x1xf32>
      %85 = vector.broadcast %84 : vector<1x1xf32> to vector<1x128xf32>
      %86 = arith.select %83, %85, %81 : vector<1x128xi1>, vector<1x128xf32>
      %c7_i32 = arith.constant 7 : i32
      %87 = vector.broadcast %c7_i32 : i32 to vector<1x128xi32>
      %88 = arith.cmpi eq, %26, %87 : vector<1x128xi32>
      %89 = vector.shape_cast %76 : vector<1x1xf32> to vector<1x1xf32>
      %90 = vector.broadcast %89 : vector<1x1xf32> to vector<1x128xf32>
      %91 = arith.select %88, %90, %86 : vector<1x128xi1>, vector<1x128xf32>
      %c0_41 = arith.constant 0 : index
      %c0_42 = arith.constant 0 : index
      %c0_43 = arith.constant 0 : index
      %92 = vector.load %arg7[%c0_41, %c0_42, %c0_43] : memref<1x1x128xf32, #tpu.memory_space<vmem>>, vector<1x1x128xf32>
      %93 = vector.shape_cast %92 : vector<1x1x128xf32> to vector<1x128xf32>
      %94 = vector.shape_cast %91 : vector<1x128xf32> to vector<1x1x128xf32>
      tpu.vector_store %arg7[%c0_41, %c0_42, %c0_43], %94 {strides = array<i32>} : memref<1x1x128xf32, #tpu.memory_space<vmem>>, vector<1x1x128xf32>,
    } else {
    }
    return
  }
  func.func @transform_0(%arg0: i32, %arg1: i32) -> (i32, i32, i32) {
    %c0_i32 = arith.constant 0 : i32
    %c0_i32_0 = arith.constant 0 : i32
    return %arg0, %arg1, %c0_i32 : i32, i32, i32
  }
  func.func @transform_1(%arg0: i32, %arg1: i32) -> (i32, i32) {
    %c0_i32 = arith.constant 0 : i32
    %c0_i32_0 = arith.constant 0 : i32
    %c0_i32_1 = arith.constant 0 : i32
    return %c0_i32, %c0_i32_0 : i32, i32
  }
  func.func @transform_2(%arg0: i32, %arg1: i32) -> (i32, i32) {
    %c0_i32 = arith.constant 0 : i32
    %c0_i32_0 = arith.constant 0 : i32
    %c0_i32_1 = arith.constant 0 : i32
    return %c0_i32, %c0_i32_0 : i32, i32
  }
  func.func @transform_3(%arg0: i32, %arg1: i32) -> (i32, i32) {
    %c0_i32 = arith.constant 0 : i32
    %c0_i32_0 = arith.constant 0 : i32
    %c0_i32_1 = arith.constant 0 : i32
    return %c0_i32, %c0_i32_0 : i32, i32
  }
  func.func @transform_4(%arg0: i32, %arg1: i32) -> (i32, i32, i32) {
    %c0_i32 = arith.constant 0 : i32
    %c0_i32_0 = arith.constant 0 : i32
    %c0_i32_1 = arith.constant 0 : i32
    return %arg0, %c0_i32, %c0_i32_0 : i32, i32, i32
  }
  func.func @transform_5(%arg0: i32, %arg1: i32) -> (i32, i32, i32) {
    %c0_i32 = arith.constant 0 : i32
    %c0_i32_0 = arith.constant 0 : i32
    %c0_i32_1 = arith.constant 0 : i32
    return %arg0, %c0_i32, %c0_i32_0 : i32, i32, i32
  }
}

</mosaic_0001>

<llo_original>
// kernel: tpu_custom_call.1
$region0: #{tpu_custom_call.1}
  #allocation0 [shape = 'u32[]', space=smem, size = 0x4, offset = 0x4, fixed_abs, tag = 'smem constant byte address 0x4 - core index']
  #allocation1 [shape = 'u32[144,128]{1,0:T(1,128)}', space=vmem, size = 0x12000, scoped, tag = 'internal scratch']
  #allocation2 [shape = 'f32[1,128]{1,0:T(1,128)}', space=vmem, size = 0x200, scoped, tag = 'scratch operand']
  %s0 = inlined_call_operand.hbm [shape: f32[2,256,128], index: 0, kind: input, shape index: {}]
  %s1 = inlined_call_operand.hbm [shape: f32[128,128], index: 1, kind: input, shape index: {}]
  %s2 = inlined_call_operand.hbm [shape: f32[128,128], index: 2, kind: input, shape index: {}]
  %s3 = inlined_call_operand.vmem [shape: f32[1,128], index: 3, kind: input, shape index: {}]
  %s4 = inlined_call_operand.vmem [shape: f32[2,1,128], index: 4, kind: input, shape index: {}]
  %s5 = inlined_call_operand.hbm [shape: f32[2,1,128], index: 5, kind: output, shape index: {}]
  %s6 = sld [smem:[#allocation0]]
  $region73: #{tpu_custom_call.1} parent=0
    _
  %s8 = ssub.s32 1, %s6
  %s9 = scalar_select 0, %s8, %s6
  $region1: #{tpu_custom_call.1} parent=0
    #allocation3 [shape = 'u8[262144]{0}', space=vmem, size = 0x40000, scoped, tag = 'input window, operand 0']
    #allocation4 [shape = 's32[2]{0}', space=sflag, size = 0x8, scoped, tag = 'scoped memory for tpu_custom_call.1']
    #allocation5 [shape = 's32[2]{0}', space=sflag, size = 0x8, scoped, tag = 'scoped memory for tpu_custom_call.1']
    #allocation6 [shape = 'u8[65536]{0}', space=vmem, size = 0x10000, scoped, tag = 'input window, operand 1, single buffered']
    #allocation7 [shape = 's32[1]{0}', space=sflag, size = 0x4, scoped, tag = 'scoped memory for tpu_custom_call.1']
    #allocation8 [shape = 'u8[65536]{0}', space=vmem, size = 0x10000, scoped, tag = 'input window, operand 2, single buffered']
    #allocation9 [shape = 'u8[1024]{0}', space=vmem, size = 0x400, scoped, tag = 'output window, operand 0']
    %10 = vsyncpa [#allocation4], 0
    %s11 = scalar_lea.sflag [#allocation4], 1
    %12 = vsyncpa %s11, 0
    %13 = vsyncpa [#allocation7], 0
    %14 = vsyncpa [#allocation5], 0
    %s15 = scalar_lea.sflag [#allocation5], 1
    %16 = vsyncpa %s15, 0
    loop: start=0, step=1, limit=4
    $region2: #{tpu_custom_call.1} parent=1 // loop_pre_header
      _
    $region3: #{tpu_custom_call.1} parent=1 // loop_header
      %s18 = sphi 0, %s22
      %p19 = scmp.ge.s32.totalorder %s18, 4
      %s25 = sphi 0, %s37
      %s26 = sphi 0, %s33
      %s27 = sphi 0, %s25
      %s28 = sphi 0, %s26
      %s29 = sphi 0, %s27
      %s30 = sphi 0, %s28
      %s42 = sphi 0, %s44
      %s45 = sphi 0, %s42
      %s46 = sphi 0, %s45
      %s62 = sphi 0, %s46
      %s66 = sphi 0, %s66
      %s68 = sphi 0, %s66
      %s69 = sphi 0, %s68
      %s83 = sphi 0, %s69
      %s87 = sphi 0, %s87
      %s89 = sphi 0, %s87
      %s90 = sphi 0, %s89
      %s104 = sphi 0, %s90
      %s108 = sphi 0, %s108
      %s110 = sphi 0, %s108
      %s111 = sphi 0, %s110
      %s125 = sphi 0, %s111
      %s131 = sphi 0, %s133
      %s134 = sphi 0, %s131
      %s135 = sphi 0, %s134
      %s151 = sphi 0, %s135
      %s157 = sphi 0, %s159
      %s160 = sphi 0, %s157
      %s161 = sphi 0, %s160
      %s177 = sphi 0, %s161
    $region4: #{tpu_custom_call.1} parent=1 // loop_header_branch
      %21 = sbr.rel (%p19) target = $region8
    $region5: #{tpu_custom_call.1} parent=1 // loop_body
      %s23 = ssub.s32 %s18, 1
      %s24 = ssub.s32 %s18, 2
      %s31 = sadd.s32 1, %s26
      %p32 = scmp.ge.s32.totalorder %s31, 1
      %s33 = scalar_select %p32, 0, %s31
      %s34 = sadd.s32 1, %s25
      %s35 = scalar_select %p32, %s34, %s25
      %p36 = scmp.ge.s32.totalorder %s35, 2
      %s37 = scalar_select %p36, 0, %s35
      %s38 = ssub.s32 %s25, %s37
      %s39 = ssub.s32 %s26, %s33
      %s40 = sor.u32 %s38, %s39
      %p41 = scmp.eq.s32.totalorder %s40, 0
      %s43 = sadd.s32 %s42, 1
      %s44 = scalar_select %p41, %s42, %s43
      %p47 = pneg %p41
      %p48 = scmp.eq.s32.totalorder %s18, 1
      %p49 = por %p47, %p48
      %p50 = scmp.ne.s32.totalorder %s42, %s45
      %p51 = scmp.eq.s32.totalorder %s18, 0
      %p52 = por %p50, %p51
      %p53 = scmp.ne.s32.totalorder %s42, %s45
      %p54 = scmp.eq.s32.totalorder %s23, 1
      %p55 = por %p53, %p54
      %p56 = scmp.ne.s32.totalorder %s45, %s46
      %p57 = scmp.eq.s32.totalorder %s23, 0
      %p58 = por %p56, %p57
      %p59 = scmp.ne.s32.totalorder %s45, %s46
      %p60 = scmp.eq.s32.totalorder %s24, 1
      %p61 = por %p59, %p60
      %p63 = scmp.ne.s32.totalorder %s46, %s62
      %p64 = scmp.eq.s32.totalorder %s24, 0
      %p65 = por %p63, %p64
      %s67 = sadd.s32 %s66, 1
      %p70 = scmp.eq.s32.totalorder %s18, 1
      %p71 = scmp.ne.s32.totalorder %s66, %s68
      %p72 = scmp.eq.s32.totalorder %s18, 0
      %p73 = por %p71, %p72
      %p74 = scmp.ne.s32.totalorder %s66, %s68
      %p75 = scmp.eq.s32.totalorder %s23, 1
      %p76 = por %p74, %p75
      %p77 = scmp.ne.s32.totalorder %s68, %s69
      %p78 = scmp.eq.s32.totalorder %s23, 0
      %p79 = por %p77, %p78
      %p80 = scmp.ne.s32.totalorder %s68, %s69
      %p81 = scmp.eq.s32.totalorder %s24, 1
      %p82 = por %p80, %p81
      %p84 = scmp.ne.s32.totalorder %s69, %s83
      %p85 = scmp.eq.s32.totalorder %s24, 0
      %p86 = por %p84, %p85
      %s88 = sadd.s32 %s87, 1
      %p91 = scmp.eq.s32.totalorder %s18, 1
      %p92 = scmp.ne.s32.totalorder %s87, %s89
      %p93 = scmp.eq.s32.totalorder %s18, 0
      %p94 = por %p92, %p93
      %p95 = scmp.ne.s32.totalorder %s87, %s89
      %p96 = scmp.eq.s32.totalorder %s23, 1
      %p97 = por %p95, %p96
      %p98 = scmp.ne.s32.totalorder %s89, %s90
      %p99 = scmp.eq.s32.totalorder %s23, 0
      %p100 = por %p98, %p99
      %p101 = scmp.ne.s32.totalorder %s89, %s90
      %p102 = scmp.eq.s32.totalorder %s24, 1
      %p103 = por %p101, %p102
      %p105 = scmp.ne.s32.totalorder %s90, %s104
      %p106 = scmp.eq.s32.totalorder %s24, 0
      %p107 = por %p105, %p106
      %s109 = sadd.s32 %s108, 1
      %p112 = scmp.eq.s32.totalorder %s18, 1
      %p113 = scmp.ne.s32.totalorder %s108, %s110
      %p114 = scmp.eq.s32.totalorder %s18, 0
      %p115 = por %p113, %p114
      %p116 = scmp.ne.s32.totalorder %s108, %s110
      %p117 = scmp.eq.s32.totalorder %s23, 1
      %p118 = por %p116, %p117
      %p119 = scmp.ne.s32.totalorder %s110, %s111
      %p120 = scmp.eq.s32.totalorder %s23, 0
      %p121 = por %p119, %p120
      %p122 = scmp.ne.s32.totalorder %s110, %s111
      %p123 = scmp.eq.s32.totalorder %s24, 1
      %p124 = por %p122, %p123
      %p126 = scmp.ne.s32.totalorder %s111, %s125
      %p127 = scmp.eq.s32.totalorder %s24, 0
      %p128 = por %p126, %p127
      %s129 = ssub.s32 %s25, %s37
      %p130 = scmp.eq.s32.totalorder %s129, 0
      %s132 = sadd.s32 %s131, 1
      %s133 = scalar_select %p130, %s131, %s132
      %p136 = pneg %p130
      %p137 = scmp.eq.s32.totalorder %s18, 1
      %p138 = por %p136, %p137
      %p139 = scmp.ne.s32.totalorder %s131, %s134
      %p140 = scmp.eq.s32.totalorder %s18, 0
      %p141 = por %p139, %p140
      %p142 = scmp.ne.s32.totalorder %s131, %s134
      %p143 = scmp.eq.s32.totalorder %s23, 1
      %p144 = por %p142, %p143
      %p145 = scmp.ne.s32.totalorder %s134, %s135
      %p146 = scmp.eq.s32.totalorder %s23, 0
      %p147 = por %p145, %p146
      %p148 = scmp.ne.s32.totalorder %s134, %s135
      %p149 = scmp.eq.s32.totalorder %s24, 1
      %p150 = por %p148, %p149
      %p152 = scmp.ne.s32.totalorder %s135, %s151
      %p153 = scmp.eq.s32.totalorder %s24, 0
      %p154 = por %p152, %p153
      %s155 = ssub.s32 %s25, %s37
      %p156 = scmp.eq.s32.totalorder %s155, 0
      %s158 = sadd.s32 %s157, 1
      %s159 = scalar_select %p156, %s157, %s158
      %p162 = pneg %p156
      %p163 = scmp.eq.s32.totalorder %s18, 1
      %p164 = por %p162, %p163
      %p165 = scmp.ne.s32.totalorder %s157, %s160
      %p166 = scmp.eq.s32.totalorder %s18, 0
      %p167 = por %p165, %p166
      %p168 = scmp.ne.s32.totalorder %s157, %s160
      %p169 = scmp.eq.s32.totalorder %s23, 1
      %p170 = por %p168, %p169
      %p171 = scmp.ne.s32.totalorder %s160, %s161
      %p172 = scmp.eq.s32.totalorder %s23, 0
      %p173 = por %p171, %p172
      %p174 = scmp.ne.s32.totalorder %s160, %s161
      %p175 = scmp.eq.s32.totalorder %s24, 1
      %p176 = por %p174, %p175
      %p178 = scmp.ne.s32.totalorder %s161, %s177
      %p179 = scmp.eq.s32.totalorder %s24, 0
      %p180 = por %p178, %p179
      %p181 = scmp.le.s32.totalorder 1, %s18
      %p182 = scmp.lt.s32.totalorder %s18, 3
      %p183 = pnand %p181, %p182
      %p184 = pneg %p183
      // Predicated region
      $region9: #{tpu_custom_call.1} parent=5 // pred_check
        _
      $region10: #{tpu_custom_call.1} parent=5 // pred_check_branch
        %186 = sbr.rel (%p183) target = $region12
      $region11: #{tpu_custom_call.1} parent=5 // pred_region
        %s187 = ssub.s32 %s18, 1
        // Predicated region
        $region13: #{tpu_custom_call.1} parent=11 // pred_check
          %p188 = pneg %p79
        $region14: #{tpu_custom_call.1} parent=11 // pred_check_branch
          %190 = sbr.rel (%p188) target = $region16
        $region15: #{tpu_custom_call.1} parent=11 // pred_region
          %s192 = ssub.s32 2048, 2048
          %193 = vsyncadd [#allocation7], %s192
          %s194 = sshll.u32 [#allocation6], 4
          %s195 = int_to_ptr.vmem [resolvable:$true] %s194
          %200 = dma.hbm_to_vmem [thread:$0]  %s1, 2048, %s195, [#allocation7], 128, 128, 8
        $region16: #{tpu_custom_call.1} parent=11 // pred_fallthru
          _
        // Predicated region
        $region17: #{tpu_custom_call.1} parent=11 // pred_check
          %p201 = pneg %p100
        $region18: #{tpu_custom_call.1} parent=11 // pred_check_branch
          %203 = sbr.rel (%p201) target = $region20
        $region19: #{tpu_custom_call.1} parent=11 // pred_region
          %s205 = ssub.s32 2048, 2048
          %206 = vsyncadd [#allocation7], %s205
          %s207 = sshll.u32 [#allocation8], 4
          %s208 = int_to_ptr.vmem [resolvable:$true] %s207
          %213 = dma.hbm_to_vmem [thread:$0]  %s2, 2048, %s208, [#allocation7], 128, 128, 8
        $region20: #{tpu_custom_call.1} parent=11 // pred_fallthru
          _
        // Predicated region
        $region21: #{tpu_custom_call.1} parent=11 // pred_check
          %p214 = pneg %p121
        $region22: #{tpu_custom_call.1} parent=11 // pred_check_branch
          %216 = sbr.rel (%p214) target = $region24
        $region23: #{tpu_custom_call.1} parent=11 // pred_region
          _
        $region24: #{tpu_custom_call.1} parent=11 // pred_fallthru
          _
      $region12: #{tpu_custom_call.1} parent=5 // pred_fallthru
        _
      %p217 = scmp.lt.s32.totalorder %s18, 2
      // Predicated region
      $region25: #{tpu_custom_call.1} parent=5 // pred_check
        %p218 = pneg %p217
      $region26: #{tpu_custom_call.1} parent=5 // pred_check_branch
        %220 = sbr.rel (%p218) target = $region28
      $region27: #{tpu_custom_call.1} parent=5 // pred_region
        // Predicated region
        $region29: #{tpu_custom_call.1} parent=27 // pred_check
          %p221 = pneg %p52
        $region30: #{tpu_custom_call.1} parent=27 // pred_check_branch
          %223 = sbr.rel (%p221) target = $region32
        $region31: #{tpu_custom_call.1} parent=27 // pred_region
          %s224 = sand.u32 %s42, 1
          %s225 = scalar_lea.sflag [#allocation4], %s224
          %s226 = sand.u32 %s42, 1
          %s227 = smul.addr %s226, 256
          %s228 = scalar_lea.vmem [#allocation3], %s227
          %s229 = smul.u32 32, %s26
          %s231 = ssub.s32 4096, 4096
          %232 = vsyncadd %s225, %s231
          %s233 = smul.addr %s25, 32
          %s234 = sadd.s32 %s229, %s233
          %s235 = smul.addr %s234, 128
          %s236 = scalar_lea.hbm %s0, %s235
          %s237 = sshll.u32 %s228, 4
          %s238 = int_to_ptr.vmem [resolvable:$true] %s237
          %243 = dma.hbm_to_vmem [thread:$0]  %s236, 4096, %s238, %s225, 128, 128, 8
        $region32: #{tpu_custom_call.1} parent=27 // pred_fallthru
          _
        // Predicated region
        $region33: #{tpu_custom_call.1} parent=27 // pred_check
          %p244 = pneg %p141
        $region34: #{tpu_custom_call.1} parent=27 // pred_check_branch
          %246 = sbr.rel (%p244) target = $region36
        $region35: #{tpu_custom_call.1} parent=27 // pred_region
          %p247 = scmp.lt.s32.totalorder %s25, 1
          %s248 = scalar_select %p247, %s25, 1
          %s249 = scalar_lea.vmem %s4, %s248
        $region36: #{tpu_custom_call.1} parent=27 // pred_fallthru
          _
      $region28: #{tpu_custom_call.1} parent=5 // pred_fallthru
        _
      %p250 = scmp.le.s32.totalorder 1, %s18
      %p251 = scmp.lt.s32.totalorder %s18, 3
      %p252 = pnand %p250, %p251
      %p253 = pneg %p252
      // Predicated region
      $region37: #{tpu_custom_call.1} parent=5 // pred_check
        _
      $region38: #{tpu_custom_call.1} parent=5 // pred_check_branch
        %255 = sbr.rel (%p252) target = $region40
      $region39: #{tpu_custom_call.1} parent=5 // pred_region
        %s256 = ssub.s32 %s18, 1
        %s257 = sand.u32 %s45, 1
        %s258 = scalar_lea.sflag [#allocation4], %s257
        %s259 = sand.u32 %s45, 1
        %s260 = smul.addr %s259, 256
        %s261 = scalar_lea.vmem [#allocation3], %s260
        // Predicated region
        $region41: #{tpu_custom_call.1} parent=39 // pred_check
          %p262 = pneg %p58
        $region42: #{tpu_custom_call.1} parent=39 // pred_check_branch
          %264 = sbr.rel (%p262) target = $region44
        $region43: #{tpu_custom_call.1} parent=39 // pred_region
          %265 = dma.done %s258, 4096
        $region44: #{tpu_custom_call.1} parent=39 // pred_fallthru
          _
        // Predicated region
        $region45: #{tpu_custom_call.1} parent=39 // pred_check
          %p266 = pneg %p79
        $region46: #{tpu_custom_call.1} parent=39 // pred_check_branch
          %268 = sbr.rel (%p266) target = $region48
        $region47: #{tpu_custom_call.1} parent=39 // pred_region
          %269 = dma.done [#allocation7], 2048
        $region48: #{tpu_custom_call.1} parent=39 // pred_fallthru
          _
        // Predicated region
        $region49: #{tpu_custom_call.1} parent=39 // pred_check
          %p270 = pneg %p100
        $region50: #{tpu_custom_call.1} parent=39 // pred_check_branch
          %272 = sbr.rel (%p270) target = $region52
        $region51: #{tpu_custom_call.1} parent=39 // pred_region
          %273 = dma.done [#allocation7], 2048
        $region52: #{tpu_custom_call.1} parent=39 // pred_fallthru
          _
        %s274 = sand.u32 %s45, 1
        %s275 = scalar_lea.sflag [#allocation4], %s274
        %s276 = sand.u32 %s45, 1
        %s277 = smul.addr %s276, 256
        %s278 = scalar_lea.vmem [#allocation3], %s277
        %p279 = pneg %p58
        %p280 = pneg %p55
        %p281 = pneg %p79
        %p282 = pneg %p76
        %p283 = pneg %p100
        %p284 = pneg %p97
        %p285 = pneg %p121
        %p286 = pneg %p118
        %p287 = scmp.lt.s32.totalorder %s27, 1
        %s288 = scalar_select %p287, %s27, 1
        %s289 = scalar_lea.vmem %s4, %s288
        %p290 = pneg %p147
        %p291 = pneg %p144
        %p292 = pneg %p173
        %p293 = pneg %p170
        %s294 = sand.u32 %s160, 1
        %s295 = scalar_lea.sflag [#allocation5], %s294
        %s296 = sand.u32 %s160, 1
        %s297 = scalar_lea.vmem [#allocation9], %s296
        %s298 = smul.u32 32, %s28
        %p299 = scmp.lt.s32.totalorder %s27, 1
        %s300 = scalar_select %p299, %s27, 1
        %s301 = scalar_lea.vmem %s4, %s300
        %p302 = scmp.eq.s32.totalorder %s28, 0
        // Predicated region
        $region53: #{tpu_custom_call.1} parent=39 // pred_check
          %p303 = pneg %p302
        $region54: #{tpu_custom_call.1} parent=39 // pred_check_branch
          %305 = sbr.rel (%p303) target = $region56
        $region55: #{tpu_custom_call.1} parent=39 // pred_region
          %306 = vst [vmem:[#allocation2] sm:$0x1] 0.0
        $region56: #{tpu_custom_call.1} parent=39 // pred_fallthru
          _
        %v307 = vld [vmem:[%s261] sm:$0xff]
        %v308 = vld [vmem:[%s261 + $0x8] sm:$0xff]
        %v309 = vld [vmem:[%s261 + $0x10] sm:$0xff]
        %v310 = vld [vmem:[%s261 + $0x18] sm:$0xff]
        %v311 = vld [vmem:[%s261 + $0x20] sm:$0xff]
        %v312 = vld [vmem:[%s261 + $0x28] sm:$0xff]
        %v313 = vld [vmem:[%s261 + $0x30] sm:$0xff]
        %v314 = vld [vmem:[%s261 + $0x38] sm:$0xff]
        %v315 = vld [vmem:[%s261 + $0x40] sm:$0xff]
        %v316 = vld [vmem:[%s261 + $0x48] sm:$0xff]
        %v317 = vld [vmem:[%s261 + $0x50] sm:$0xff]
        %v318 = vld [vmem:[%s261 + $0x58] sm:$0xff]
        %v319 = vld [vmem:[%s261 + $0x60] sm:$0xff]
        %v320 = vld [vmem:[%s261 + $0x68] sm:$0xff]
        %v321 = vld [vmem:[%s261 + $0x70] sm:$0xff]
        %v322 = vld [vmem:[%s261 + $0x78] sm:$0xff]
        %v323 = vld [vmem:[%s261 + $0x80] sm:$0xff]
        %v324 = vld [vmem:[%s261 + $0x88] sm:$0xff]
        %v325 = vld [vmem:[%s261 + $0x90] sm:$0xff]
        %v326 = vld [vmem:[%s261 + $0x98] sm:$0xff]
        %v327 = vld [vmem:[%s261 + $0xa0] sm:$0xff]
        %v328 = vld [vmem:[%s261 + $0xa8] sm:$0xff]
        %v329 = vld [vmem:[%s261 + $0xb0] sm:$0xff]
        %v330 = vld [vmem:[%s261 + $0xb8] sm:$0xff]
        %v331 = vld [vmem:[%s261 + $0xc0] sm:$0xff]
        %v332 = vld [vmem:[%s261 + $0xc8] sm:$0xff]
        %v333 = vld [vmem:[%s261 + $0xd0] sm:$0xff]
        %v334 = vld [vmem:[%s261 + $0xd8] sm:$0xff]
        %v335 = vld [vmem:[%s261 + $0xe0] sm:$0xff]
        %v336 = vld [vmem:[%s261 + $0xe8] sm:$0xff]
        %v337 = vld [vmem:[%s261 + $0xf0] sm:$0xff]
        %v338 = vld [vmem:[%s261 + $0xf8] sm:$0xff]
        %v339 = vld [vmem:[#allocation6] sm:$0xff]
        %v340 = vld [vmem:[#allocation6 + $0x8] sm:$0xff]
        %v341 = vld [vmem:[#allocation6 + $0x10] sm:$0xff]
        %v342 = vld [vmem:[#allocation6 + $0x18] sm:$0xff]
        %v343 = vld [vmem:[#allocation6 + $0x20] sm:$0xff]
        %v344 = vld [vmem:[#allocation6 + $0x28] sm:$0xff]
        %v345 = vld [vmem:[#allocation6 + $0x30] sm:$0xff]
        %v346 = vld [vmem:[#allocation6 + $0x38] sm:$0xff]
        %v347 = vld [vmem:[#allocation6 + $0x40] sm:$0xff]
        %v348 = vld [vmem:[#allocation6 + $0x48] sm:$0xff]
        %v349 = vld [vmem:[#allocation6 + $0x50] sm:$0xff]
        %v350 = vld [vmem:[#allocation6 + $0x58] sm:$0xff]
        %v351 = vld [vmem:[#allocation6 + $0x60] sm:$0xff]
        %v352 = vld [vmem:[#allocation6 + $0x68] sm:$0xff]
        %v353 = vld [vmem:[#allocation6 + $0x70] sm:$0xff]
        %v354 = vld [vmem:[#allocation6 + $0x78] sm:$0xff]
        %355 = vmatprep.subr.mxu0 0.0
        %356 = vmatpush1.msra.mxu0 %v354
        %357 = vmatprep.subr.mxu0 0.0
        %358 = vmatpush1.msra.mxu0 %v353
        %359 = vmatprep.subr.mxu0 0.0
        %360 = vmatpush1.msra.mxu0 %v352
        %361 = vmatprep.subr.mxu0 0.0
        %362 = vmatpush1.msra.mxu0 %v351
        %363 = vmatprep.subr.mxu0 0.0
        %364 = vmatpush1.msra.mxu0 %v350
        %365 = vmatprep.subr.mxu0 0.0
        %366 = vmatpush1.msra.mxu0 %v349
        %367 = vmatprep.subr.mxu0 0.0
        %368 = vmatpush1.msra.mxu0 %v348
        %369 = vmatprep.subr.mxu0 0.0
        %370 = vmatpush1.msra.mxu0 %v347
        %371 = vmatprep.subr.mxu0 0.0
        %372 = vmatpush1.msra.mxu0 %v346
        %373 = vmatprep.subr.mxu0 0.0
        %374 = vmatpush1.msra.mxu0 %v345
        %375 = vmatprep.subr.mxu0 0.0
        %376 = vmatpush1.msra.mxu0 %v344
        %377 = vmatprep.subr.mxu0 0.0
        %378 = vmatpush1.msra.mxu0 %v343
        %379 = vmatprep.subr.mxu0 0.0
        %380 = vmatpush1.msra.mxu0 %v342
        %381 = vmatprep.subr.mxu0 0.0
        %382 = vmatpush1.msra.mxu0 %v341
        %383 = vmatprep.subr.mxu0 0.0
        %384 = vmatpush1.msra.mxu0 %v340
        %385 = vmatprep.subr.mxu0 0.0
        %386 = vmatpush1.msra.mxu0 %v339
        %387 = vmatprep.subr.mxu0 0.0
        %388 = vmatpush2.msra.mxu0 0.0
        %389 = vmatprep.subr.mxu0 0.0
        %390 = vmatpush2.msra.mxu0 0.0
        %391 = vmatprep.subr.mxu0 0.0
        %392 = vmatpush2.msra.mxu0 0.0
        %393 = vmatprep.subr.mxu0 0.0
        %394 = vmatpush2.msra.mxu0 0.0
        %395 = vmatprep.subr.mxu0 0.0
        %396 = vmatpush2.msra.mxu0 0.0
        %397 = vmatprep.subr.mxu0 0.0
        %398 = vmatpush2.msra.mxu0 0.0
        %399 = vmatprep.subr.mxu0 0.0
        %400 = vmatpush2.msra.mxu0 0.0
        %401 = vmatprep.subr.mxu0 0.0
        %402 = vmatpush2.msra.mxu0 0.0
        %403 = vmatprep.subr.mxu0 0.0
        %404 = vmatpush2.msra.mxu0 0.0
        %405 = vmatprep.subr.mxu0 0.0
        %406 = vmatpush2.msra.mxu0 0.0
        %407 = vmatprep.subr.mxu0 0.0
        %408 = vmatpush2.msra.mxu0 0.0
        %409 = vmatprep.subr.mxu0 0.0
        %410 = vmatpush2.msra.mxu0 0.0
        %411 = vmatprep.subr.mxu0 0.0
        %412 = vmatpush2.msra.mxu0 0.0
        %413 = vmatprep.subr.mxu0 0.0
        %414 = vmatpush2.msra.mxu0 0.0
        %415 = vmatprep.subr.mxu0 0.0
        %416 = vmatpush2.msra.mxu0 0.0
        %417 = vmatprep.subr.mxu0 0.0
        %418 = vmatpush2.msra.mxu0 0.0
        %419 = vmatprep.mubr.f32.mxu0 0.0
        %420 = vmatmul.mubr.f32.gmra.mxu0 %v307
        %v421 = vpop.f32.mrf.mxu0
        %v422 = vadd.f32 0.0, %v421
        %v423 = vpop.f32.mrf.mxu0
        %424 = vmatprep.mubr.f32.mxu0 0.0
        %425 = vmatmul.mubr.f32.gmra.mxu0 %v308
        %v426 = vpop.f32.mrf.mxu0
        %v427 = vadd.f32 0.0, %v426
        %v428 = vpop.f32.mrf.mxu0
        %429 = vmatprep.mubr.f32.mxu0 0.0
        %430 = vmatmul.mubr.f32.gmra.mxu0 %v309
        %v431 = vpop.f32.mrf.mxu0
        %v432 = vadd.f32 0.0, %v431
        %v433 = vpop.f32.mrf.mxu0
        %434 = vmatprep.mubr.f32.mxu0 0.0
        %435 = vmatmul.mubr.f32.gmra.mxu0 %v310
        %v436 = vpop.f32.mrf.mxu0
        %v437 = vadd.f32 0.0, %v436
        %v438 = vpop.f32.mrf.mxu0
        %439 = vmatprep.mubr.f32.mxu0 0.0
        %440 = vmatmul.mubr.f32.gmra.mxu0 %v311
        %v441 = vpop.f32.mrf.mxu0
        %v442 = vadd.f32 0.0, %v441
        %v443 = vpop.f32.mrf.mxu0
        %444 = vmatprep.mubr.f32.mxu0 0.0
        %445 = vmatmul.mubr.f32.gmra.mxu0 %v312
        %v446 = vpop.f32.mrf.mxu0
        %v447 = vadd.f32 0.0, %v446
        %v448 = vpop.f32.mrf.mxu0
        %449 = vmatprep.mubr.f32.mxu0 0.0
        %450 = vmatmul.mubr.f32.gmra.mxu0 %v313
        %v451 = vpop.f32.mrf.mxu0
        %v452 = vadd.f32 0.0, %v451
        %v453 = vpop.f32.mrf.mxu0
        %454 = vmatprep.mubr.f32.mxu0 0.0
        %455 = vmatmul.mubr.f32.gmra.mxu0 %v314
        %v456 = vpop.f32.mrf.mxu0
        %v457 = vadd.f32 0.0, %v456
        %v458 = vpop.f32.mrf.mxu0
        %459 = vmatprep.mubr.f32.mxu0 0.0
        %460 = vmatmul.mubr.f32.gmra.mxu0 %v315
        %v461 = vpop.f32.mrf.mxu0
        %v462 = vadd.f32 0.0, %v461
        %v463 = vpop.f32.mrf.mxu0
        %464 = vmatprep.mubr.f32.mxu0 0.0
        %465 = vmatmul.mubr.f32.gmra.mxu0 %v316
        %v466 = vpop.f32.mrf.mxu0
        %v467 = vadd.f32 0.0, %v466
        %v468 = vpop.f32.mrf.mxu0
        %469 = vmatprep.mubr.f32.mxu0 0.0
        %470 = vmatmul.mubr.f32.gmra.mxu0 %v317
        %v471 = vpop.f32.mrf.mxu0
        %v472 = vadd.f32 0.0, %v471
        %v473 = vpop.f32.mrf.mxu0
        %474 = vmatprep.mubr.f32.mxu0 0.0
        %475 = vmatmul.mubr.f32.gmra.mxu0 %v318
        %v476 = vpop.f32.mrf.mxu0
        %v477 = vadd.f32 0.0, %v476
        %v478 = vpop.f32.mrf.mxu0
        %479 = vmatprep.mubr.f32.mxu0 0.0
        %480 = vmatmul.mubr.f32.gmra.mxu0 %v319
        %v481 = vpop.f32.mrf.mxu0
        %v482 = vadd.f32 0.0, %v481
        %v483 = vpop.f32.mrf.mxu0
        %484 = vmatprep.mubr.f32.mxu0 0.0
        %485 = vmatmul.mubr.f32.gmra.mxu0 %v320
        %v486 = vpop.f32.mrf.mxu0
        %v487 = vadd.f32 0.0, %v486
        %v488 = vpop.f32.mrf.mxu0
        %489 = vmatprep.mubr.f32.mxu0 0.0
        %490 = vmatmul.mubr.f32.gmra.mxu0 %v321
        %v491 = vpop.f32.mrf.mxu0
        %v492 = vadd.f32 0.0, %v491
        %v493 = vpop.f32.mrf.mxu0
        %494 = vmatprep.mubr.f32.mxu0 0.0
        %495 = vmatmul.mubr.f32.gmra.mxu0 %v322
        %v496 = vpop.f32.mrf.mxu0
        %v497 = vadd.f32 0.0, %v496
        %v498 = vpop.f32.mrf.mxu0
        %499 = vmatprep.mubr.f32.mxu0 0.0
        %500 = vmatmul.mubr.f32.gmra.mxu0 %v323
        %v501 = vpop.f32.mrf.mxu0
        %v502 = vadd.f32 0.0, %v501
        %v503 = vpop.f32.mrf.mxu0
        %504 = vmatprep.mubr.f32.mxu0 0.0
        %505 = vmatmul.mubr.f32.gmra.mxu0 %v324
        %v506 = vpop.f32.mrf.mxu0
        %v507 = vadd.f32 0.0, %v506
        %v508 = vpop.f32.mrf.mxu0
        %509 = vmatprep.mubr.f32.mxu0 0.0
        %510 = vmatmul.mubr.f32.gmra.mxu0 %v325
        %v511 = vpop.f32.mrf.mxu0
        %v512 = vadd.f32 0.0, %v511
        %v513 = vpop.f32.mrf.mxu0
        %514 = vmatprep.mubr.f32.mxu0 0.0
        %515 = vmatmul.mubr.f32.gmra.mxu0 %v326
        %v516 = vpop.f32.mrf.mxu0
        %v517 = vadd.f32 0.0, %v516
        %v518 = vpop.f32.mrf.mxu0
        %519 = vmatprep.mubr.f32.mxu0 0.0
        %520 = vmatmul.mubr.f32.gmra.mxu0 %v327
        %v521 = vpop.f32.mrf.mxu0
        %v522 = vadd.f32 0.0, %v521
        %v523 = vpop.f32.mrf.mxu0
        %524 = vmatprep.mubr.f32.mxu0 0.0
        %525 = vmatmul.mubr.f32.gmra.mxu0 %v328
        %v526 = vpop.f32.mrf.mxu0
        %v527 = vadd.f32 0.0, %v526
        %v528 = vpop.f32.mrf.mxu0
        %529 = vmatprep.mubr.f32.mxu0 0.0
        %530 = vmatmul.mubr.f32.gmra.mxu0 %v329
        %v531 = vpop.f32.mrf.mxu0
        %v532 = vadd.f32 0.0, %v531
        %v533 = vpop.f32.mrf.mxu0
        %534 = vmatprep.mubr.f32.mxu0 0.0
        %535 = vmatmul.mubr.f32.gmra.mxu0 %v330
        %v536 = vpop.f32.mrf.mxu0
        %v537 = vadd.f32 0.0, %v536
        %v538 = vpop.f32.mrf.mxu0
        %539 = vmatprep.mubr.f32.mxu0 0.0
        %540 = vmatmul.mubr.f32.gmra.mxu0 %v331
        %v541 = vpop.f32.mrf.mxu0
        %v542 = vadd.f32 0.0, %v541
        %v543 = vpop.f32.mrf.mxu0
        %544 = vmatprep.mubr.f32.mxu0 0.0
        %545 = vmatmul.mubr.f32.gmra.mxu0 %v332
        %v546 = vpop.f32.mrf.mxu0
        %v547 = vadd.f32 0.0, %v546
        %v548 = vpop.f32.mrf.mxu0
        %549 = vmatprep.mubr.f32.mxu0 0.0
        %550 = vmatmul.mubr.f32.gmra.mxu0 %v333
        %v551 = vpop.f32.mrf.mxu0
        %v552 = vadd.f32 0.0, %v551
        %v553 = vpop.f32.mrf.mxu0
        %554 = vmatprep.mubr.f32.mxu0 0.0
        %555 = vmatmul.mubr.f32.gmra.mxu0 %v334
        %v556 = vpop.f32.mrf.mxu0
        %v557 = vadd.f32 0.0, %v556
        %v558 = vpop.f32.mrf.mxu0
        %559 = vmatprep.mubr.f32.mxu0 0.0
        %560 = vmatmul.mubr.f32.gmra.mxu0 %v335
        %v561 = vpop.f32.mrf.mxu0
        %v562 = vadd.f32 0.0, %v561
        %v563 = vpop.f32.mrf.mxu0
        %564 = vmatprep.mubr.f32.mxu0 0.0
        %565 = vmatmul.mubr.f32.gmra.mxu0 %v336
        %v566 = vpop.f32.mrf.mxu0
        %v567 = vadd.f32 0.0, %v566
        %v568 = vpop.f32.mrf.mxu0
        %569 = vmatprep.mubr.f32.mxu0 0.0
        %570 = vmatmul.mubr.f32.gmra.mxu0 %v337
        %v571 = vpop.f32.mrf.mxu0
        %v572 = vadd.f32 0.0, %v571
        %v573 = vpop.f32.mrf.mxu0
        %574 = vmatprep.mubr.f32.mxu0 0.0
        %575 = vmatmul.mubr.f32.gmra.mxu0 %v338
        %v576 = vpop.f32.mrf.mxu0
        %v577 = vadd.f32 0.0, %v576
        %v578 = vpop.f32.mrf.mxu0
        %579 = vdwg.mxu0
        %v580 = vmax.f32 %v422, 0.0
        %v581 = vmax.f32 %v427, 0.0
        %v582 = vmax.f32 %v432, 0.0
        %v583 = vmax.f32 %v437, 0.0
        %v584 = vmax.f32 %v442, 0.0
        %v585 = vmax.f32 %v447, 0.0
        %v586 = vmax.f32 %v452, 0.0
        %v587 = vmax.f32 %v457, 0.0
        %v588 = vmax.f32 %v462, 0.0
        %v589 = vmax.f32 %v467, 0.0
        %v590 = vmax.f32 %v472, 0.0
        %v591 = vmax.f32 %v477, 0.0
        %v592 = vmax.f32 %v482, 0.0
        %v593 = vmax.f32 %v487, 0.0
        %v594 = vmax.f32 %v492, 0.0
        %v595 = vmax.f32 %v497, 0.0
        %v596 = vmax.f32 %v502, 0.0
        %v597 = vmax.f32 %v507, 0.0
        %v598 = vmax.f32 %v512, 0.0
        %v599 = vmax.f32 %v517, 0.0
        %v600 = vmax.f32 %v522, 0.0
        %v601 = vmax.f32 %v527, 0.0
        %v602 = vmax.f32 %v532, 0.0
        %v603 = vmax.f32 %v537, 0.0
        %v604 = vmax.f32 %v542, 0.0
        %v605 = vmax.f32 %v547, 0.0
        %v606 = vmax.f32 %v552, 0.0
        %v607 = vmax.f32 %v557, 0.0
        %v608 = vmax.f32 %v562, 0.0
        %v609 = vmax.f32 %v567, 0.0
        %v610 = vmax.f32 %v572, 0.0
        %v611 = vmax.f32 %v577, 0.0
        %v612 = vld [vmem:[#allocation2] sm:$0x1]
        %v613 = vadd.f32 %v580, %v581
        %v614 = vadd.f32 %v613, %v582
        %v615 = vadd.f32 %v614, %v583
        %v616 = vadd.f32 %v615, %v584
        %v617 = vadd.f32 %v616, %v585
        %v618 = vadd.f32 %v617, %v586
        %v619 = vadd.f32 %v618, %v587
        %v620 = vadd.f32 %v619, %v588
        %v621 = vadd.f32 %v620, %v589
        %v622 = vadd.f32 %v621, %v590
        %v623 = vadd.f32 %v622, %v591
        %v624 = vadd.f32 %v623, %v592
        %v625 = vadd.f32 %v624, %v593
        %v626 = vadd.f32 %v625, %v594
        %v627 = vadd.f32 %v626, %v595
        %v628 = vadd.f32 %v627, %v596
        %v629 = vadd.f32 %v628, %v597
        %v630 = vadd.f32 %v629, %v598
        %v631 = vadd.f32 %v630, %v599
        %v632 = vadd.f32 %v631, %v600
        %v633 = vadd.f32 %v632, %v601
        %v634 = vadd.f32 %v633, %v602
        %v635 = vadd.f32 %v634, %v603
        %v636 = vadd.f32 %v635, %v604
        %v637 = vadd.f32 %v636, %v605
        %v638 = vadd.f32 %v637, %v606
        %v639 = vadd.f32 %v638, %v607
        %v640 = vadd.f32 %v639, %v608
        %v641 = vadd.f32 %v640, %v609
        %v642 = vadd.f32 %v641, %v610
        %v643 = vadd.f32 %v642, %v611
        %v644 = vrot.slane %v643, 4
        %v645 = vadd.f32 %v643, %v644
        %v646 = vrot.slane %v645, 2
        %v647 = vadd.f32 %v645, %v646
        %v648 = vrot.slane %v647, 1
        %v649 = vadd.f32 %v647, %v648
        %v650 = vadd.f32 %v612, %v649
        %651 = vst [vmem:[#allocation2] sm:$0x1] %v650
        // Predicated region
        $region57: #{tpu_custom_call.1} parent=39 // pred_check
          %p652 = pneg %p302
        $region58: #{tpu_custom_call.1} parent=39 // pred_check_branch
          %654 = sbr.rel (%p652) target = $region60
        $region59: #{tpu_custom_call.1} parent=39 // pred_region
          %v655 = vld [vmem:[#allocation2] sm:$0x1]
          %v656 = vmul.f32 %v655, 0.00390625
          %v657 = vld [vmem:[#allocation8] sm:$0xff]
          %v658 = vld [vmem:[#allocation8 + $0x8] sm:$0xff]
          %v659 = vld [vmem:[#allocation8 + $0x10] sm:$0xff]
          %v660 = vld [vmem:[#allocation8 + $0x18] sm:$0xff]
          %v661 = vld [vmem:[#allocation8 + $0x20] sm:$0xff]
          %v662 = vld [vmem:[#allocation8 + $0x28] sm:$0xff]
          %v663 = vld [vmem:[#allocation8 + $0x30] sm:$0xff]
          %v664 = vld [vmem:[#allocation8 + $0x38] sm:$0xff]
          %v665 = vld [vmem:[#allocation8 + $0x40] sm:$0xff]
          %v666 = vld [vmem:[#allocation8 + $0x48] sm:$0xff]
          %v667 = vld [vmem:[#allocation8 + $0x50] sm:$0xff]
          %v668 = vld [vmem:[#allocation8 + $0x58] sm:$0xff]
          %v669 = vld [vmem:[#allocation8 + $0x60] sm:$0xff]
          %v670 = vld [vmem:[#allocation8 + $0x68] sm:$0xff]
          %v671 = vld [vmem:[#allocation8 + $0x70] sm:$0xff]
          %v672 = vld [vmem:[#allocation8 + $0x78] sm:$0xff]
          %v673 = vld [vmem:[%s3] sm:$0x1]
          %674 = vmatprep.subr.mxu0 0.0
          %675 = vmatpush1.msra.mxu0 %v672
          %676 = vmatprep.subr.mxu0 0.0
          %677 = vmatpush1.msra.mxu0 %v671
          %678 = vmatprep.subr.mxu0 0.0
          %679 = vmatpush1.msra.mxu0 %v670
          %680 = vmatprep.subr.mxu0 0.0
          %681 = vmatpush1.msra.mxu0 %v669
          %682 = vmatprep.subr.mxu0 0.0
          %683 = vmatpush1.msra.mxu0 %v668
          %684 = vmatprep.subr.mxu0 0.0
          %685 = vmatpush1.msra.mxu0 %v667
          %686 = vmatprep.subr.mxu0 0.0
          %687 = vmatpush1.msra.mxu0 %v666
          %688 = vmatprep.subr.mxu0 0.0
          %689 = vmatpush1.msra.mxu0 %v665
          %690 = vmatprep.subr.mxu0 0.0
          %691 = vmatpush1.msra.mxu0 %v664
          %692 = vmatprep.subr.mxu0 0.0
          %693 = vmatpush1.msra.mxu0 %v663
          %694 = vmatprep.subr.mxu0 0.0
          %695 = vmatpush1.msra.mxu0 %v662
          %696 = vmatprep.subr.mxu0 0.0
          %697 = vmatpush1.msra.mxu0 %v661
          %698 = vmatprep.subr.mxu0 0.0
          %699 = vmatpush1.msra.mxu0 %v660
          %700 = vmatprep.subr.mxu0 0.0
          %701 = vmatpush1.msra.mxu0 %v659
          %702 = vmatprep.subr.mxu0 0.0
          %703 = vmatpush1.msra.mxu0 %v658
          %704 = vmatprep.subr.mxu0 0.0
          %705 = vmatpush1.msra.mxu0 %v657
          %706 = vmatprep.subr.mxu0 0.0
          %707 = vmatpush2.msra.mxu0 0.0
          %708 = vmatprep.subr.mxu0 0.0
          %709 = vmatpush2.msra.mxu0 0.0
          %710 = vmatprep.subr.mxu0 0.0
          %711 = vmatpush2.msra.mxu0 0.0
          %712 = vmatprep.subr.mxu0 0.0
          %713 = vmatpush2.msra.mxu0 0.0
          %714 = vmatprep.subr.mxu0 0.0
          %715 = vmatpush2.msra.mxu0 0.0
          %716 = vmatprep.subr.mxu0 0.0
          %717 = vmatpush2.msra.mxu0 0.0
          %718 = vmatprep.subr.mxu0 0.0
          %719 = vmatpush2.msra.mxu0 0.0
          %720 = vmatprep.subr.mxu0 0.0
          %721 = vmatpush2.msra.mxu0 0.0
          %722 = vmatprep.subr.mxu0 0.0
          %723 = vmatpush2.msra.mxu0 0.0
          %724 = vmatprep.subr.mxu0 0.0
          %725 = vmatpush2.msra.mxu0 0.0
          %726 = vmatprep.subr.mxu0 0.0
          %727 = vmatpush2.msra.mxu0 0.0
          %728 = vmatprep.subr.mxu0 0.0
          %729 = vmatpush2.msra.mxu0 0.0
          %730 = vmatprep.subr.mxu0 0.0
          %731 = vmatpush2.msra.mxu0 0.0
          %732 = vmatprep.subr.mxu0 0.0
          %733 = vmatpush2.msra.mxu0 0.0
          %734 = vmatprep.subr.mxu0 0.0
          %735 = vmatpush2.msra.mxu0 0.0
          %736 = vmatprep.subr.mxu0 0.0
          %737 = vmatpush2.msra.mxu0 0.0
          %738 = vmatprep.mubr.f32.mxu0 0.0
          %739 = vmatmul.mubr.f32.gmra.mxu0 %v656
          %v740 = vpop.f32.mrf.mxu0
          %v741 = vadd.f32 %v673, %v740
          %v742 = vpop.f32.mrf.mxu0
          %743 = vdwg.mxu0
          %v744 = vld [vmem:[%s301] sm:$0x1]
          %v745 = vlaneseq
          %v746 = vand.u32 %v745, 127
          %v747 = vsub.f32 0.0, %v741
          %v748 = vmul.f32 %v747, 1.442695
          %v749 = vpow.pop %v748
          %v750 = vadd.f32 %v749, 1.0
          %v751 = vrcp.pop %v750
          %vm752 = vcmp.eq.s32.totalorder %v746, 4
          %v753 = vsel %vm752, %v751, %v741
          %v754 = vsel %vm752, %v741, 0.0
          %vm755 = vcmask 1040384
          %v756 = vsel %vm755, %v754, 0.0
          %757 = vadd.xlane.f32.xlu0 %v756
          %v758 = vpop.xlane.xlu0 %757
          %v759 = vsel %vm752, %v744, 0.0
          %v760 = vsel %vm755, %v759, 0.0
          %761 = vadd.xlane.f32.xlu0 %v760
          %v762 = vpop.xlane.xlu0 %761
          %v763 = vmax.f32 %v762, 0.05
          %v764 = vmin.f32 %v763, 0.95
          %vm765 = vcmp.gt.f32.partialorder %v764, 0.5
          %v766 = vsel %vm765, 1, 0
          %v767 = vcvt.s32.f32 %v766
          %vm768 = vcmp.lt.s32.totalorder %v746, 4
          %v769 = vsub.f32 %v741, %v744
          %v770 = vand.u32 2147483647, %v769
          %v771 = vsel %vm768, %v770, 0.0
          %v772 = vsel %vm755, %v771, 0.0
          %773 = vadd.xlane.f32.xlu0 %v772
          %v774 = vpop.xlane.xlu0 %773
          %v775 = vmul.f32 %v767, %v774
          %v776 = vmax.f32 %v758, 0.0
          %v777 = vmul.f32 %v758, %v764
          %v778 = vsub.f32 %v776, %v777
          %v779 = vand.u32 2147483647, %v758
          %v780 = vsub.f32 0.0, %v779
          %v781 = vmul.f32 %v780, 1.442695
          %v782 = vpow.pop %v781
          %v783 = vadd.f32 %v782, 1.0
          %v784 = vlog2.pop %v783
          %v785 = vmul.f32 %v784, 0.6931472
          %v786 = vadd.f32 %v778, %v785
          %vm787 = vcmp.eq.s32.totalorder %v746, 5
          %v788 = vsel %vm787, %v775, %v753
          %vm789 = vcmp.eq.s32.totalorder %v746, 6
          %v790 = vsel %vm789, %v767, %v788
          %vm791 = vcmp.eq.s32.totalorder %v746, 7
          %v792 = vsel %vm791, %v786, %v790
          %793 = vst [vmem:[%s297] sm:$0x1] %v792
        $region60: #{tpu_custom_call.1} parent=39 // pred_fallthru
          _
        %s794 = sand.u32 %s160, 1
        %s795 = scalar_lea.sflag [#allocation5], %s794
        %s796 = sand.u32 %s160, 1
        %s797 = scalar_lea.vmem [#allocation9], %s796
        // Predicated region
        $region61: #{tpu_custom_call.1} parent=39 // pred_check
          %p798 = pneg %p170
        $region62: #{tpu_custom_call.1} parent=39 // pred_check_branch
          %800 = sbr.rel (%p798) target = $region64
        $region63: #{tpu_custom_call.1} parent=39 // pred_region
          %s802 = ssub.s32 16, 16
          %803 = vsyncadd %s795, %s802
          %s804 = smul.addr %s27, 16
          %s805 = scalar_lea.hbm %s5, %s804
          %s807 = sshll.u32 %s797, 4
          %s808 = int_to_ptr.vmem [resolvable:$true] %s807
          %810 = dma.vmem_to_hbm [thread:$0]  %s808, 16, %s805, %s795
        $region64: #{tpu_custom_call.1} parent=39 // pred_fallthru
          _
      $region40: #{tpu_custom_call.1} parent=5 // pred_fallthru
        _
      %p811 = scmp.le.s32.totalorder 2, %s18
      // Predicated region
      $region65: #{tpu_custom_call.1} parent=5 // pred_check
        %p812 = pneg %p811
      $region66: #{tpu_custom_call.1} parent=5 // pred_check_branch
        %814 = sbr.rel (%p812) target = $region68
      $region67: #{tpu_custom_call.1} parent=5 // pred_region
        %s815 = ssub.s32 %s18, 2
        // Predicated region
        $region69: #{tpu_custom_call.1} parent=67 // pred_check
          %p816 = pneg %p176
        $region70: #{tpu_custom_call.1} parent=67 // pred_check_branch
          %818 = sbr.rel (%p816) target = $region72
        $region71: #{tpu_custom_call.1} parent=67 // pred_region
          %s819 = sand.u32 %s161, 1
          %s820 = scalar_lea.sflag [#allocation5], %s819
          %s821 = sand.u32 %s161, 1
          %s822 = scalar_lea.vmem [#allocation9], %s821
          %823 = dma.done %s820, 16
        $region72: #{tpu_custom_call.1} parent=67 // pred_fallthru
          _
      $region68: #{tpu_custom_call.1} parent=5 // pred_fallthru
        _
    $region6: #{tpu_custom_call.1} parent=1 // loop_footer
      %s22 = sadd.s32 1, %s18
    $region7: #{tpu_custom_call.1} parent=1 // loop_footer_branch
      %17 = sbr.rel target = $region3
    $region8: #{tpu_custom_call.1} parent=1 // loop_exit
      _
    %824 = vsyncpa [#allocation4], 1
    %s825 = scalar_lea.sflag [#allocation4], 1
    %826 = vsyncpa %s825, 1
    %827 = vsyncpa [#allocation7], 1
    %828 = vsyncpa [#allocation5], 1
    %s829 = scalar_lea.sflag [#allocation5], 1
    %830 = vsyncpa %s829, 1

</llo_original>
